<compile_context>
chip_gen: v7x
topology: tpu7x:2x2x1
jax: 0.10.0
libtpu: 0.0.40
codegen_flags: <defaults>
</compile_context>

<pallas_src>
import numpy as np
import jax
import jax.numpy as jnp
from jax import lax
from jax.experimental import pallas as pl
from jax.experimental.pallas import tpu as pltpu

FILTER_SIZE = 5
STRIDE = 2
PAD = (FILTER_SIZE - 2) // 2                 # = 1
KH = KW = 3                                  # hanning(5)[1:-1] has 3 taps

# Deterministic filter, exactly as in the module's __init__.
_a = np.hanning(FILTER_SIZE)[1:-1]           # [0.5, 1.0, 0.5]
_w1d = _a / _a.sum()                         # separable 1-D factor [0.25, 0.5, 0.25]
_G = np.outer(_w1d, _w1d).astype(np.float32)  # == g / g.sum() in the torch module


def _sep_matrices(h, w, oh, ow):
    """Rw (oh, h) and Cw (w, ow): 1-D hanning taps + stride-2 + implicit zero pad."""
    rw = np.zeros((oh, h), np.float32)
    for i in range(oh):
        for k in range(KH):
            r = STRIDE * i - PAD + k
            if 0 <= r < h:
                rw[i, r] = _w1d[k]
    cw = np.zeros((w, ow), np.float32)
    for j in range(ow):
        for k in range(KW):
            c = STRIDE * j - PAD + k
            if 0 <= c < w:
                cw[c, j] = _w1d[k]
    return rw, cw


def _vmem_limit_bytes():
    """Scoped-VMEM limit derived from the actual device (v5e/v6e 128 MiB, v7x 64 MiB)."""
    try:
        cap = int(pltpu.get_tpu_info().vmem_capacity_bytes)
    except Exception:
        cap = 64 * 1024 * 1024               # conservative (v7x-sized) fallback
    return min(int(0.75 * cap), 100 * 1024 * 1024)


def _pick_plane_batch(nc, h, w, oh, ow, in_isz, out_isz, budget_bytes, cap=256):
    """Plane batch B and padded plane count so every live buffer fits the budget.

    Accounts for the f32 upcast of x**2, the (B, H, OW) intermediate, the
    broadcast Rw operand and double-buffered input/output blocks (not just the
    raw input bytes).  `cap` bounds compile-time / per-step latency.
    """
    per_plane = (
        2 * h * w * in_isz          # double-buffered input block
        + h * w * 4                 # x**2 in f32
        + h * ow * 4                # y = x2 @ Cw (f32)
        + oh * h * 4                # broadcast Rw operand (f32)
        + oh * ow * 4               # accumulator / sqrt result (f32)
        + 2 * oh * ow * out_isz     # double-buffered output block
    )
    max_b = int(max(1, min(cap, budget_bytes // max(1, per_plane))))
    if nc <= max_b:
        return nc, nc                               # whole problem in one step
    # Prefer a divisor of nc (no padding pre-pass) if it is reasonably large ...
    best_div = 1
    for d in range(1, max_b + 1):
        if nc % d == 0:
            best_div = d
    if 2 * best_div >= max_b:
        return best_div, nc
    # ... otherwise pad nc up to a multiple of the budget-sized B (a few dummy
    # planes are far cheaper than a step-count blowup).
    b = max_b
    nc_pad = ((nc + b - 1) // b) * b
    return b, nc_pad


def _l2pool_kernel(x_ref, cw_ref, rw_ref, o_ref):
    # x_ref: (B, H, W); cw_ref: (W, OW); rw_ref: (OH, H); o_ref: (B, OH, OW)
    bb, hh, ww = x_ref.shape
    oh, ow = o_ref.shape[1], o_ref.shape[2]

    # NOTE: casting x2 to bf16 would ~4x MXU throughput on v5e (taps are exact in
    # bf16) but drops accuracy to ~1e-3 rel; kept f32 to match metric tolerance.
    x2 = x_ref[...].astype(jnp.float32)
    x2 = x2 * x2                                            # input ** 2 (VPU)

    # W-direction taps + stride-2: one big MXU matmul over all B planes.
    y = jnp.dot(x2.reshape(bb * hh, ww), cw_ref[...],
                preferred_element_type=jnp.float32)
    y = y.reshape(bb, hh, ow)                               # (B, H, OW)

    # H-direction taps + stride-2: single batched contraction (no per-plane
    # Python unroll, no transposes) -> result lands directly as (B, OH, OW).
    rw_b = jnp.broadcast_to(rw_ref[...][None, :, :], (bb, oh, hh))
    acc = lax.dot_general(rw_b, y,
                          dimension_numbers=(((2,), (1,)), ((0,), (0,))),
                          preferred_element_type=jnp.float32)

    o_ref[...] = jnp.sqrt(acc + 1e-12).astype(o_ref.dtype)


def l2pooling(x):
    """x: (N, C, H, W) float array -> (N, C, OH, OW). Matches torch L2pooling.forward."""
    n, c, h, w = x.shape
    nc = n * c
    oh = (h + 2 * PAD - KH) // STRIDE + 1
    ow = (w + 2 * PAD - KW) // STRIDE + 1

    rw_np, cw_np = _sep_matrices(h, w, oh, ow)

    vmem_limit = _vmem_limit_bytes()
    b, nc_pad = _pick_plane_batch(nc, h, w, oh, ow,
                                  x.dtype.itemsize, x.dtype.itemsize,
                                  budget_bytes=int(0.7 * vmem_limit))

    xr = x.reshape(nc, h, w)                 # free reshape: no pad / transpose pre-pass
    if nc_pad != nc:
        xr = jnp.concatenate(
            [xr, jnp.zeros((nc_pad - nc, h, w), xr.dtype)], axis=0)

    cost = pl.CostEstimate(
        flops=2 * nc * h * ow * (w + oh),
        transcendentals=nc * oh * ow,
        bytes_accessed=nc * (h * w + oh * ow) * x.dtype.itemsize
                       + (w * ow + oh * h) * 4,
    )

    out = pl.pallas_call(
        _l2pool_kernel,
        out_shape=jax.ShapeDtypeStruct((nc_pad, oh, ow), x.dtype),
        grid=(nc_pad // b,),
        in_specs=[
            pl.BlockSpec((b, h, w), lambda i: (i, 0, 0)),
            pl.BlockSpec((w, ow), lambda i: (0, 0)),    # Cw: DMA'd once, stays resident
            pl.BlockSpec((oh, h), lambda i: (0, 0)),    # Rw: DMA'd once, stays resident
        ],
        out_specs=pl.BlockSpec((b, oh, ow), lambda i: (i, 0, 0)),
        compiler_params=pltpu.CompilerParams(
            dimension_semantics=("parallel",),          # megacore sharding on v7x
            vmem_limit_bytes=vmem_limit,
        ),
        cost_estimate=cost,
    )(xr, jnp.asarray(cw_np), jnp.asarray(rw_np))

    if nc_pad != nc:
        out = out[:nc]
    return out.reshape(n, c, oh, ow)


def l2pooling_ref(x):
    """Pure-JAX reference (mirrors F.conv2d with groups=C)."""
    c = x.shape[1]
    filt = jnp.tile(jnp.asarray(_G)[None, None, :, :], (c, 1, 1, 1))  # (C,1,3,3)
    out = lax.conv_general_dilated(
        x * x, filt,
        window_strides=(STRIDE, STRIDE),
        padding=[(PAD, PAD), (PAD, PAD)],
        dimension_numbers=("NCHW", "OIHW", "NCHW"),
        feature_group_count=c)
    return jnp.sqrt(out + 1e-12)


if __name__ == "__main__":
    key = jax.random.PRNGKey(0)
    x = jax.random.normal(key, (2, 4, 16, 16), dtype=jnp.float32)

    y = jax.block_until_ready(l2pooling(x))
    y_ref = jax.block_until_ready(l2pooling_ref(x))

    assert y.shape == (2, 4, 8, 8), y.shape
    np.testing.assert_allclose(np.asarray(y), np.asarray(y_ref), rtol=1e-5, atol=1e-5)

    print("KERNEL_OK")
</pallas_src>

<mosaic_0001>
module attributes {stable_mosaic.version = 11 : i64} {
  func.func @_l2pool_kernel(%arg0: i32, %arg1: memref<8x16x16xf32, #tpu.memory_space<vmem>>, %arg2: memref<16x8xf32, #tpu.memory_space<vmem>>, %arg3: memref<8x16xf32, #tpu.memory_space<vmem>>, %arg4: memref<8x8x8xf32, #tpu.memory_space<vmem>>) attributes {dimension_semantics = [#tpu.dimension_semantics<parallel>], iteration_bounds = array<i64: 1>, scalar_prefetch = 0 : i64, scratch_operands = 0 : i64, tpu.core_type = #tpu.core_type<tc>, window_params = [{transform_indices = @transform_0, window_bounds = array<i64: 8, 16, 16>}, {pipeline_mode = #tpu.pipeline_mode<synchronous>, transform_indices = @transform_1, window_bounds = array<i64: 16, 8>}, {pipeline_mode = #tpu.pipeline_mode<synchronous>, transform_indices = @transform_2, window_bounds = array<i64: 8, 16>}, {transform_indices = @transform_3, window_bounds = array<i64: 8, 8, 8>}]} {
    %c0 = arith.constant 0 : index
    %c0_0 = arith.constant 0 : index
    %c0_1 = arith.constant 0 : index
    %0 = vector.load %arg1[%c0, %c0_0, %c0_1] : memref<8x16x16xf32, #tpu.memory_space<vmem>>, vector<8x16x16xf32>
    %1 = arith.mulf %0, %0 : vector<8x16x16xf32>
    %2 = vector.shape_cast %1 : vector<8x16x16xf32> to vector<128x16xf32>
    %c0_2 = arith.constant 0 : index
    %c0_3 = arith.constant 0 : index
    %3 = vector.load %arg2[%c0_2, %c0_3] : memref<16x8xf32, #tpu.memory_space<vmem>>, vector<16x8xf32>
    %cst = arith.constant dense<0.000000e+00> : vector<128x8xf32>
    %4 = tpu.matmul %2, %3, %cst {dimension_numbers = #tpu.dot_dimension_numbers<[1], [0], [0], [1], [0, 0, 1, 1], [], []>} : vector<128x16xf32>, vector<16x8xf32>, vector<128x8xf32> -> vector<128x8xf32>
    %5 = vector.shape_cast %4 : vector<128x8xf32> to vector<8x16x8xf32>
    %c0_4 = arith.constant 0 : index
    %c0_5 = arith.constant 0 : index
    %6 = vector.load %arg3[%c0_4, %c0_5] : memref<8x16xf32, #tpu.memory_space<vmem>>, vector<8x16xf32>
    %7 = vector.shape_cast %6 : vector<8x16xf32> to vector<1x8x16xf32>
    %8 = vector.shape_cast %7 : vector<1x8x16xf32> to vector<1x8x16xf32>
    %9 = vector.broadcast %8 : vector<1x8x16xf32> to vector<8x8x16xf32>
    %cst_6 = arith.constant dense<0.000000e+00> : vector<8x8x8xf32>
    %10 = tpu.matmul %9, %5, %cst_6 {dimension_numbers = #tpu.dot_dimension_numbers<[2], [1], [1], [2], [0, 0, 0, 1, 1, 2], [0], [0]>} : vector<8x8x16xf32>, vector<8x16x8xf32>, vector<8x8x8xf32> -> vector<8x8x8xf32>
    %cst_7 = arith.constant 9.99999996E-13 : f32
    %11 = vector.broadcast %cst_7 : f32 to vector<8x8x8xf32>
    %12 = arith.addf %10, %11 : vector<8x8x8xf32>
    %13 = math.sqrt %12 : vector<8x8x8xf32>
    %c0_8 = arith.constant 0 : index
    %c0_9 = arith.constant 0 : index
    %c0_10 = arith.constant 0 : index
    %14 = vector.load %arg4[%c0_8, %c0_9, %c0_10] : memref<8x8x8xf32, #tpu.memory_space<vmem>>, vector<8x8x8xf32>
    tpu.vector_store %arg4[%c0_8, %c0_9, %c0_10], %13 {strides = array<i32>} : memref<8x8x8xf32, #tpu.memory_space<vmem>>, vector<8x8x8xf32>,
    return
  }
  func.func @transform_0(%arg0: i32) -> (i32, i32, i32) {
    %c0_i32 = arith.constant 0 : i32
    %c0_i32_0 = arith.constant 0 : i32
    %c0_i32_1 = arith.constant 0 : i32
    return %arg0, %c0_i32, %c0_i32_0 : i32, i32, i32
  }
  func.func @transform_1(%arg0: i32) -> (i32, i32) {
    %c0_i32 = arith.constant 0 : i32
    %c0_i32_0 = arith.constant 0 : i32
    %c0_i32_1 = arith.constant 0 : i32
    return %c0_i32, %c0_i32_0 : i32, i32
  }
  func.func @transform_2(%arg0: i32) -> (i32, i32) {
    %c0_i32 = arith.constant 0 : i32
    %c0_i32_0 = arith.constant 0 : i32
    %c0_i32_1 = arith.constant 0 : i32
    return %c0_i32, %c0_i32_0 : i32, i32
  }
  func.func @transform_3(%arg0: i32) -> (i32, i32, i32) {
    %c0_i32 = arith.constant 0 : i32
    %c0_i32_0 = arith.constant 0 : i32
    %c0_i32_1 = arith.constant 0 : i32
    return %arg0, %c0_i32, %c0_i32_0 : i32, i32, i32
  }
}

</mosaic_0001>

<llo_original>
// kernel: tpu_custom_call.1
$region0: #{tpu_custom_call.1}
  #allocation0 [shape = 'u32[]', space=smem, size = 0x4, offset = 0x4, fixed_abs, tag = 'smem constant byte address 0x4 - core index']
  #allocation1 [shape = 'u32[144,128]{1,0:T(1,128)}', space=vmem, size = 0x12000, scoped, tag = 'internal scratch']
  %s0 = inlined_call_operand.hbm [shape: f32[8,16,16], index: 0, kind: input, shape index: {}]
  %s1 = inlined_call_operand.vmem [shape: f32[16,8], index: 1, kind: input, shape index: {}]
  %s2 = inlined_call_operand.vmem [shape: f32[8,16], index: 2, kind: input, shape index: {}]
  %s3 = inlined_call_operand.hbm [shape: f32[8,8,8], index: 3, kind: output, shape index: {}]
  %s4 = sld [smem:[#allocation0]]
  $region26: #{tpu_custom_call.1} parent=0
    _
  %s6 = ssub.s32 1, %s4
  %s7 = scalar_select 0, %s6, %s4
  $region1: #{tpu_custom_call.1} parent=0
    #allocation2 [shape = 'u8[65536]{0}', space=vmem, size = 0x10000, scoped, tag = 'input window, operand 0, single buffered']
    #allocation3 [shape = 's32[1]{0}', space=sflag, size = 0x4, scoped, tag = 'scoped memory for tpu_custom_call.1']
    #allocation4 [shape = 's32[1]{0}', space=sflag, size = 0x4, scoped, tag = 'scoped memory for tpu_custom_call.1']
    #allocation5 [shape = 'u8[32768]{0}', space=vmem, size = 0x8000, scoped, tag = 'output window, operand 0, single buffered']
    %8 = vsyncpa [#allocation3], 0
    %9 = vsyncpa [#allocation4], 0
    // Predicated region
    $region2: #{tpu_custom_call.1} parent=1 // pred_check
      _
    $region3: #{tpu_custom_call.1} parent=1 // pred_check_branch
      %11 = sbr.rel (0) target = $region5
    $region4: #{tpu_custom_call.1} parent=1 // pred_region
      %s13 = ssub.s32 2048, 2048
      %14 = vsyncadd [#allocation3], %s13
      %s15 = sshll.u32 [#allocation2], 4
      %s16 = int_to_ptr.vmem [resolvable:$true] %s15
      %21 = dma.hbm_to_vmem [thread:$0]  %s0, 2048, %s16, [#allocation3], 128, 128, 8
    $region5: #{tpu_custom_call.1} parent=1 // pred_fallthru
      _
    // Predicated region
    $region6: #{tpu_custom_call.1} parent=1 // pred_check
      _
    $region7: #{tpu_custom_call.1} parent=1 // pred_check_branch
      %23 = sbr.rel (0) target = $region9
    $region8: #{tpu_custom_call.1} parent=1 // pred_region
      _
    $region9: #{tpu_custom_call.1} parent=1 // pred_fallthru
      _
    // Predicated region
    $region10: #{tpu_custom_call.1} parent=1 // pred_check
      _
    $region11: #{tpu_custom_call.1} parent=1 // pred_check_branch
      %25 = sbr.rel (0) target = $region13
    $region12: #{tpu_custom_call.1} parent=1 // pred_region
      _
    $region13: #{tpu_custom_call.1} parent=1 // pred_fallthru
      _
    // Predicated region
    $region14: #{tpu_custom_call.1} parent=1 // pred_check
      _
    $region15: #{tpu_custom_call.1} parent=1 // pred_check_branch
      %27 = sbr.rel (0) target = $region17
    $region16: #{tpu_custom_call.1} parent=1 // pred_region
      %28 = dma.done [#allocation3], 2048
    $region17: #{tpu_custom_call.1} parent=1 // pred_fallthru
      _
    %v29 = vld [vmem:[#allocation2] sm:$0xff]
    %v30 = vld [vmem:[#allocation2 + $0x8] sm:$0xff]
    %v31 = vld [vmem:[#allocation2 + $0x10] sm:$0xff]
    %v32 = vld [vmem:[#allocation2 + $0x18] sm:$0xff]
    %v33 = vld [vmem:[#allocation2 + $0x20] sm:$0xff]
    %v34 = vld [vmem:[#allocation2 + $0x28] sm:$0xff]
    %v35 = vld [vmem:[#allocation2 + $0x30] sm:$0xff]
    %v36 = vld [vmem:[#allocation2 + $0x38] sm:$0xff]
    %v37 = vld [vmem:[#allocation2 + $0x40] sm:$0xff]
    %v38 = vld [vmem:[#allocation2 + $0x48] sm:$0xff]
    %v39 = vld [vmem:[#allocation2 + $0x50] sm:$0xff]
    %v40 = vld [vmem:[#allocation2 + $0x58] sm:$0xff]
    %v41 = vld [vmem:[#allocation2 + $0x60] sm:$0xff]
    %v42 = vld [vmem:[#allocation2 + $0x68] sm:$0xff]
    %v43 = vld [vmem:[#allocation2 + $0x70] sm:$0xff]
    %v44 = vld [vmem:[#allocation2 + $0x78] sm:$0xff]
    %v45 = vmul.f32 %v29, %v29
    %v46 = vmul.f32 %v30, %v30
    %v47 = vmul.f32 %v31, %v31
    %v48 = vmul.f32 %v32, %v32
    %v49 = vmul.f32 %v33, %v33
    %v50 = vmul.f32 %v34, %v34
    %v51 = vmul.f32 %v35, %v35
    %v52 = vmul.f32 %v36, %v36
    %v53 = vmul.f32 %v37, %v37
    %v54 = vmul.f32 %v38, %v38
    %v55 = vmul.f32 %v39, %v39
    %v56 = vmul.f32 %v40, %v40
    %v57 = vmul.f32 %v41, %v41
    %v58 = vmul.f32 %v42, %v42
    %v59 = vmul.f32 %v43, %v43
    %v60 = vmul.f32 %v44, %v44
    %v61 = vld [vmem:[%s1] sm:$0xff]
    %v62 = vld [vmem:[%s1 + $0x8] sm:$0xff]
    %vm63 = vcmask 130048
    %v65 = vsel %vm63, %v45, 0
    %v68 = vsel %vm63, %v46, 0
    %v71 = vsel %vm63, %v47, 0
    %v74 = vsel %vm63, %v48, 0
    %v77 = vsel %vm63, %v49, 0
    %v80 = vsel %vm63, %v50, 0
    %v83 = vsel %vm63, %v51, 0
    %v86 = vsel %vm63, %v52, 0
    %v89 = vsel %vm63, %v53, 0
    %v92 = vsel %vm63, %v54, 0
    %v95 = vsel %vm63, %v55, 0
    %v98 = vsel %vm63, %v56, 0
    %v101 = vsel %vm63, %v57, 0
    %v104 = vsel %vm63, %v58, 0
    %v107 = vsel %vm63, %v59, 0
    %v110 = vsel %vm63, %v60, 0
    %112 = vmatprep.subr.mxu0 0.0
    %113 = vmatpush1.msra.mxu0 %v61
    %114 = vmatprep.subr.mxu0 0.0
    %115 = vmatpush1.msra.mxu0 %v62
    %116 = vmatprep.subr.mxu0 0.0
    %117 = vmatpush1.msra.mxu0 0.0
    %118 = vmatprep.subr.mxu0 0.0
    %119 = vmatpush1.msra.mxu0 0.0
    %120 = vmatprep.subr.mxu0 0.0
    %121 = vmatpush1.msra.mxu0 0.0
    %122 = vmatprep.subr.mxu0 0.0
    %123 = vmatpush1.msra.mxu0 0.0
    %124 = vmatprep.subr.mxu0 0.0
    %125 = vmatpush1.msra.mxu0 0.0
    %126 = vmatprep.subr.mxu0 0.0
    %127 = vmatpush1.msra.mxu0 0.0
    %128 = vmatprep.subr.mxu0 0.0
    %129 = vmatpush1.msra.mxu0 0.0
    %130 = vmatprep.subr.mxu0 0.0
    %131 = vmatpush1.msra.mxu0 0.0
    %132 = vmatprep.subr.mxu0 0.0
    %133 = vmatpush1.msra.mxu0 0.0
    %134 = vmatprep.subr.mxu0 0.0
    %135 = vmatpush1.msra.mxu0 0.0
    %136 = vmatprep.subr.mxu0 0.0
    %137 = vmatpush1.msra.mxu0 0.0
    %138 = vmatprep.subr.mxu0 0.0
    %139 = vmatpush1.msra.mxu0 0.0
    %140 = vmatprep.subr.mxu0 0.0
    %141 = vmatpush1.msra.mxu0 0.0
    %142 = vmatprep.subr.mxu0 0.0
    %143 = vmatpush1.msra.mxu0 0.0
    %144 = vmatprep.subr.mxu0 0.0
    %145 = vmatpush1.msra.mxu0 0.0
    %146 = vmatprep.subr.mxu0 0.0
    %147 = vmatpush1.msra.mxu0 0.0
    %148 = vmatprep.subr.mxu0 0.0
    %149 = vmatpush1.msra.mxu0 0.0
    %150 = vmatprep.subr.mxu0 0.0
    %151 = vmatpush1.msra.mxu0 0.0
    %152 = vmatprep.subr.mxu0 0.0
    %153 = vmatpush1.msra.mxu0 0.0
    %154 = vmatprep.subr.mxu0 0.0
    %155 = vmatpush1.msra.mxu0 0.0
    %156 = vmatprep.subr.mxu0 0.0
    %157 = vmatpush1.msra.mxu0 0.0
    %158 = vmatprep.subr.mxu0 0.0
    %159 = vmatpush1.msra.mxu0 0.0
    %160 = vmatprep.subr.mxu0 0.0
    %161 = vmatpush1.msra.mxu0 0.0
    %162 = vmatprep.subr.mxu0 0.0
    %163 = vmatpush1.msra.mxu0 0.0
    %164 = vmatprep.subr.mxu0 0.0
    %165 = vmatpush1.msra.mxu0 0.0
    %166 = vmatprep.subr.mxu0 0.0
    %167 = vmatpush1.msra.mxu0 0.0
    %168 = vmatprep.subr.mxu0 0.0
    %169 = vmatpush1.msra.mxu0 0.0
    %170 = vmatprep.subr.mxu0 0.0
    %171 = vmatpush1.msra.mxu0 0.0
    %172 = vmatprep.subr.mxu0 0.0
    %173 = vmatpush1.msra.mxu0 0.0
    %174 = vmatprep.subr.mxu0 0.0
    %175 = vmatpush1.msra.mxu0 0.0
    %176 = vmatprep.mubr.f32.mxu0 0.0
    %177 = vmatmul.mubr.f32.gmra.mrb[0].mxu0 %v65
    %v178 = vpop.f32.mrb[0].mxu0
    %v179 = vadd.f32 0.0, %v178
    %v180 = vpop.f32.mrb[0].mxu0
    %181 = vmatprep.mubr.f32.mxu0 0.0
    %182 = vmatmul.mubr.f32.gmra.mrb[0].mxu0 %v68
    %v183 = vpop.f32.mrb[0].mxu0
    %v184 = vadd.f32 0.0, %v183
    %v185 = vpop.f32.mrb[0].mxu0
    %186 = vmatprep.mubr.f32.mxu0 0.0
    %187 = vmatmul.mubr.f32.gmra.mrb[0].mxu0 %v71
    %v188 = vpop.f32.mrb[0].mxu0
    %v189 = vadd.f32 0.0, %v188
    %v190 = vpop.f32.mrb[0].mxu0
    %191 = vmatprep.mubr.f32.mxu0 0.0
    %192 = vmatmul.mubr.f32.gmra.mrb[0].mxu0 %v74
    %v193 = vpop.f32.mrb[0].mxu0
    %v194 = vadd.f32 0.0, %v193
    %v195 = vpop.f32.mrb[0].mxu0
    %196 = vmatprep.mubr.f32.mxu0 0.0
    %197 = vmatmul.mubr.f32.gmra.mrb[0].mxu0 %v77
    %v198 = vpop.f32.mrb[0].mxu0
    %v199 = vadd.f32 0.0, %v198
    %v200 = vpop.f32.mrb[0].mxu0
    %201 = vmatprep.mubr.f32.mxu0 0.0
    %202 = vmatmul.mubr.f32.gmra.mrb[0].mxu0 %v80
    %v203 = vpop.f32.mrb[0].mxu0
    %v204 = vadd.f32 0.0, %v203
    %v205 = vpop.f32.mrb[0].mxu0
    %206 = vmatprep.mubr.f32.mxu0 0.0
    %207 = vmatmul.mubr.f32.gmra.mrb[0].mxu0 %v83
    %v208 = vpop.f32.mrb[0].mxu0
    %v209 = vadd.f32 0.0, %v208
    %v210 = vpop.f32.mrb[0].mxu0
    %211 = vmatprep.mubr.f32.mxu0 0.0
    %212 = vmatmul.mubr.f32.gmra.mrb[0].mxu0 %v86
    %v213 = vpop.f32.mrb[0].mxu0
    %v214 = vadd.f32 0.0, %v213
    %v215 = vpop.f32.mrb[0].mxu0
    %216 = vmatprep.mubr.f32.mxu0 0.0
    %217 = vmatmul.mubr.f32.gmra.mrb[0].mxu0 %v89
    %v218 = vpop.f32.mrb[0].mxu0
    %v219 = vadd.f32 0.0, %v218
    %v220 = vpop.f32.mrb[0].mxu0
    %221 = vmatprep.mubr.f32.mxu0 0.0
    %222 = vmatmul.mubr.f32.gmra.mrb[0].mxu0 %v92
    %v223 = vpop.f32.mrb[0].mxu0
    %v224 = vadd.f32 0.0, %v223
    %v225 = vpop.f32.mrb[0].mxu0
    %226 = vmatprep.mubr.f32.mxu0 0.0
    %227 = vmatmul.mubr.f32.gmra.mrb[0].mxu0 %v95
    %v228 = vpop.f32.mrb[0].mxu0
    %v229 = vadd.f32 0.0, %v228
    %v230 = vpop.f32.mrb[0].mxu0
    %231 = vmatprep.mubr.f32.mxu0 0.0
    %232 = vmatmul.mubr.f32.gmra.mrb[0].mxu0 %v98
    %v233 = vpop.f32.mrb[0].mxu0
    %v234 = vadd.f32 0.0, %v233
    %v235 = vpop.f32.mrb[0].mxu0
    %236 = vmatprep.mubr.f32.mxu0 0.0
    %237 = vmatmul.mubr.f32.gmra.mrb[0].mxu0 %v101
    %v238 = vpop.f32.mrb[0].mxu0
    %v239 = vadd.f32 0.0, %v238
    %v240 = vpop.f32.mrb[0].mxu0
    %241 = vmatprep.mubr.f32.mxu0 0.0
    %242 = vmatmul.mubr.f32.gmra.mrb[0].mxu0 %v104
    %v243 = vpop.f32.mrb[0].mxu0
    %v244 = vadd.f32 0.0, %v243
    %v245 = vpop.f32.mrb[0].mxu0
    %246 = vmatprep.mubr.f32.mxu0 0.0
    %247 = vmatmul.mubr.f32.gmra.mrb[0].mxu0 %v107
    %v248 = vpop.f32.mrb[0].mxu0
    %v249 = vadd.f32 0.0, %v248
    %v250 = vpop.f32.mrb[0].mxu0
    %251 = vmatprep.mubr.f32.mxu0 0.0
    %252 = vmatmul.mubr.f32.gmra.mrb[0].mxu0 %v110
    %v253 = vpop.f32.mrb[0].mxu0
    %v254 = vadd.f32 0.0, %v253
    %v255 = vpop.f32.mrb[0].mxu0
    %256 = vdwg.mxu0
    %v257 = vld [vmem:[%s2] sm:$0xff]
    %v259 = vsel %vm63, %v257, 0
    %261 = vmatprep.subr.mxu0 0.0
    %262 = vmatpush1.msra.mxu0 %v179
    %263 = vmatprep.subr.mxu0 0.0
    %264 = vmatpush1.msra.mxu0 %v184
    %265 = vmatprep.subr.mxu0 0.0
    %266 = vmatpush1.msra.mxu0 0.0
    %267 = vmatprep.subr.mxu0 0.0
    %268 = vmatpush1.msra.mxu0 0.0
    %269 = vmatprep.subr.mxu0 0.0
    %270 = vmatpush1.msra.mxu0 0.0
    %271 = vmatprep.subr.mxu0 0.0
    %272 = vmatpush1.msra.mxu0 0.0
    %273 = vmatprep.subr.mxu0 0.0
    %274 = vmatpush1.msra.mxu0 0.0
    %275 = vmatprep.subr.mxu0 0.0
    %276 = vmatpush1.msra.mxu0 0.0
    %277 = vmatprep.subr.mxu0 0.0
    %278 = vmatpush1.msra.mxu0 0.0
    %279 = vmatprep.subr.mxu0 0.0
    %280 = vmatpush1.msra.mxu0 0.0
    %281 = vmatprep.subr.mxu0 0.0
    %282 = vmatpush1.msra.mxu0 0.0
    %283 = vmatprep.subr.mxu0 0.0
    %284 = vmatpush1.msra.mxu0 0.0
    %285 = vmatprep.subr.mxu0 0.0
    %286 = vmatpush1.msra.mxu0 0.0
    %287 = vmatprep.subr.mxu0 0.0
    %288 = vmatpush1.msra.mxu0 0.0
    %289 = vmatprep.subr.mxu0 0.0
    %290 = vmatpush1.msra.mxu0 0.0
    %291 = vmatprep.subr.mxu0 0.0
    %292 = vmatpush1.msra.mxu0 0.0
    %293 = vmatprep.subr.mxu0 0.0
    %294 = vmatpush1.msra.mxu0 0.0
    %295 = vmatprep.subr.mxu0 0.0
    %296 = vmatpush1.msra.mxu0 0.0
    %297 = vmatprep.subr.mxu0 0.0
    %298 = vmatpush1.msra.mxu0 0.0
    %299 = vmatprep.subr.mxu0 0.0
    %300 = vmatpush1.msra.mxu0 0.0
    %301 = vmatprep.subr.mxu0 0.0
    %302 = vmatpush1.msra.mxu0 0.0
    %303 = vmatprep.subr.mxu0 0.0
    %304 = vmatpush1.msra.mxu0 0.0
    %305 = vmatprep.subr.mxu0 0.0
    %306 = vmatpush1.msra.mxu0 0.0
    %307 = vmatprep.subr.mxu0 0.0
    %308 = vmatpush1.msra.mxu0 0.0
    %309 = vmatprep.subr.mxu0 0.0
    %310 = vmatpush1.msra.mxu0 0.0
    %311 = vmatprep.subr.mxu0 0.0
    %312 = vmatpush1.msra.mxu0 0.0
    %313 = vmatprep.subr.mxu0 0.0
    %314 = vmatpush1.msra.mxu0 0.0
    %315 = vmatprep.subr.mxu0 0.0
    %316 = vmatpush1.msra.mxu0 0.0
    %317 = vmatprep.subr.mxu0 0.0
    %318 = vmatpush1.msra.mxu0 0.0
    %319 = vmatprep.subr.mxu0 0.0
    %320 = vmatpush1.msra.mxu0 0.0
    %321 = vmatprep.subr.mxu0 0.0
    %322 = vmatpush1.msra.mxu0 0.0
    %323 = vmatprep.subr.mxu0 0.0
    %324 = vmatpush1.msra.mxu0 0.0
    %325 = vmatprep.mubr.f32.mxu0 0.0
    %326 = vmatmul.mubr.f32.gmra.mrb[0].mxu0 %v259
    %v327 = vpop.f32.mrb[0].mxu0
    %v328 = vadd.f32 1e-12, %v327
    %v329 = vpop.f32.mrb[0].mxu0
    %330 = vdwg.mxu0
    %331 = vmatprep.subr.mxu0 0.0
    %332 = vmatpush1.msra.mxu0 %v189
    %333 = vmatprep.subr.mxu0 0.0
    %334 = vmatpush1.msra.mxu0 %v194
    %335 = vmatprep.subr.mxu0 0.0
    %336 = vmatpush1.msra.mxu0 0.0
    %337 = vmatprep.subr.mxu0 0.0
    %338 = vmatpush1.msra.mxu0 0.0
    %339 = vmatprep.subr.mxu0 0.0
    %340 = vmatpush1.msra.mxu0 0.0
    %341 = vmatprep.subr.mxu0 0.0
    %342 = vmatpush1.msra.mxu0 0.0
    %343 = vmatprep.subr.mxu0 0.0
    %344 = vmatpush1.msra.mxu0 0.0
    %345 = vmatprep.subr.mxu0 0.0
    %346 = vmatpush1.msra.mxu0 0.0
    %347 = vmatprep.subr.mxu0 0.0
    %348 = vmatpush1.msra.mxu0 0.0
    %349 = vmatprep.subr.mxu0 0.0
    %350 = vmatpush1.msra.mxu0 0.0
    %351 = vmatprep.subr.mxu0 0.0
    %352 = vmatpush1.msra.mxu0 0.0
    %353 = vmatprep.subr.mxu0 0.0
    %354 = vmatpush1.msra.mxu0 0.0
    %355 = vmatprep.subr.mxu0 0.0
    %356 = vmatpush1.msra.mxu0 0.0
    %357 = vmatprep.subr.mxu0 0.0
    %358 = vmatpush1.msra.mxu0 0.0
    %359 = vmatprep.subr.mxu0 0.0
    %360 = vmatpush1.msra.mxu0 0.0
    %361 = vmatprep.subr.mxu0 0.0
    %362 = vmatpush1.msra.mxu0 0.0
    %363 = vmatprep.subr.mxu0 0.0
    %364 = vmatpush1.msra.mxu0 0.0
    %365 = vmatprep.subr.mxu0 0.0
    %366 = vmatpush1.msra.mxu0 0.0
    %367 = vmatprep.subr.mxu0 0.0
    %368 = vmatpush1.msra.mxu0 0.0
    %369 = vmatprep.subr.mxu0 0.0
    %370 = vmatpush1.msra.mxu0 0.0
    %371 = vmatprep.subr.mxu0 0.0
    %372 = vmatpush1.msra.mxu0 0.0
    %373 = vmatprep.subr.mxu0 0.0
    %374 = vmatpush1.msra.mxu0 0.0
    %375 = vmatprep.subr.mxu0 0.0
    %376 = vmatpush1.msra.mxu0 0.0
    %377 = vmatprep.subr.mxu0 0.0
    %378 = vmatpush1.msra.mxu0 0.0
    %379 = vmatprep.subr.mxu0 0.0
    %380 = vmatpush1.msra.mxu0 0.0
    %381 = vmatprep.subr.mxu0 0.0
    %382 = vmatpush1.msra.mxu0 0.0
    %383 = vmatprep.subr.mxu0 0.0
    %384 = vmatpush1.msra.mxu0 0.0
    %385 = vmatprep.subr.mxu0 0.0
    %386 = vmatpush1.msra.mxu0 0.0
    %387 = vmatprep.subr.mxu0 0.0
    %388 = vmatpush1.msra.mxu0 0.0
    %389 = vmatprep.subr.mxu0 0.0
    %390 = vmatpush1.msra.mxu0 0.0
    %391 = vmatprep.subr.mxu0 0.0
    %392 = vmatpush1.msra.mxu0 0.0
    %393 = vmatprep.subr.mxu0 0.0
    %394 = vmatpush1.msra.mxu0 0.0
    %395 = vmatprep.mubr.f32.mxu0 0.0
    %396 = vmatmul.mubr.f32.gmra.mrb[0].mxu0 %v259
    %v397 = vpop.f32.mrb[0].mxu0
    %v398 = vadd.f32 1e-12, %v397
    %v399 = vpop.f32.mrb[0].mxu0
    %400 = vdwg.mxu0
    %401 = vmatprep.subr.mxu0 0.0
    %402 = vmatpush1.msra.mxu0 %v199
    %403 = vmatprep.subr.mxu0 0.0
    %404 = vmatpush1.msra.mxu0 %v204
    %405 = vmatprep.subr.mxu0 0.0
    %406 = vmatpush1.msra.mxu0 0.0
    %407 = vmatprep.subr.mxu0 0.0
    %408 = vmatpush1.msra.mxu0 0.0
    %409 = vmatprep.subr.mxu0 0.0
    %410 = vmatpush1.msra.mxu0 0.0
    %411 = vmatprep.subr.mxu0 0.0
    %412 = vmatpush1.msra.mxu0 0.0
    %413 = vmatprep.subr.mxu0 0.0
    %414 = vmatpush1.msra.mxu0 0.0
    %415 = vmatprep.subr.mxu0 0.0
    %416 = vmatpush1.msra.mxu0 0.0
    %417 = vmatprep.subr.mxu0 0.0
    %418 = vmatpush1.msra.mxu0 0.0
    %419 = vmatprep.subr.mxu0 0.0
    %420 = vmatpush1.msra.mxu0 0.0
    %421 = vmatprep.subr.mxu0 0.0
    %422 = vmatpush1.msra.mxu0 0.0
    %423 = vmatprep.subr.mxu0 0.0
    %424 = vmatpush1.msra.mxu0 0.0
    %425 = vmatprep.subr.mxu0 0.0
    %426 = vmatpush1.msra.mxu0 0.0
    %427 = vmatprep.subr.mxu0 0.0
    %428 = vmatpush1.msra.mxu0 0.0
    %429 = vmatprep.subr.mxu0 0.0
    %430 = vmatpush1.msra.mxu0 0.0
    %431 = vmatprep.subr.mxu0 0.0
    %432 = vmatpush1.msra.mxu0 0.0
    %433 = vmatprep.subr.mxu0 0.0
    %434 = vmatpush1.msra.mxu0 0.0
    %435 = vmatprep.subr.mxu0 0.0
    %436 = vmatpush1.msra.mxu0 0.0
    %437 = vmatprep.subr.mxu0 0.0
    %438 = vmatpush1.msra.mxu0 0.0
    %439 = vmatprep.subr.mxu0 0.0
    %440 = vmatpush1.msra.mxu0 0.0
    %441 = vmatprep.subr.mxu0 0.0
    %442 = vmatpush1.msra.mxu0 0.0
    %443 = vmatprep.subr.mxu0 0.0
    %444 = vmatpush1.msra.mxu0 0.0
    %445 = vmatprep.subr.mxu0 0.0
    %446 = vmatpush1.msra.mxu0 0.0
    %447 = vmatprep.subr.mxu0 0.0
    %448 = vmatpush1.msra.mxu0 0.0
    %449 = vmatprep.subr.mxu0 0.0
    %450 = vmatpush1.msra.mxu0 0.0
    %451 = vmatprep.subr.mxu0 0.0
    %452 = vmatpush1.msra.mxu0 0.0
    %453 = vmatprep.subr.mxu0 0.0
    %454 = vmatpush1.msra.mxu0 0.0
    %455 = vmatprep.subr.mxu0 0.0
    %456 = vmatpush1.msra.mxu0 0.0
    %457 = vmatprep.subr.mxu0 0.0
    %458 = vmatpush1.msra.mxu0 0.0
    %459 = vmatprep.subr.mxu0 0.0
    %460 = vmatpush1.msra.mxu0 0.0
    %461 = vmatprep.subr.mxu0 0.0
    %462 = vmatpush1.msra.mxu0 0.0
    %463 = vmatprep.subr.mxu0 0.0
    %464 = vmatpush1.msra.mxu0 0.0
    %465 = vmatprep.mubr.f32.mxu0 0.0
    %466 = vmatmul.mubr.f32.gmra.mrb[0].mxu0 %v259
    %v467 = vpop.f32.mrb[0].mxu0
    %v468 = vadd.f32 1e-12, %v467
    %v469 = vpop.f32.mrb[0].mxu0
    %470 = vdwg.mxu0
    %471 = vmatprep.subr.mxu0 0.0
    %472 = vmatpush1.msra.mxu0 %v209
    %473 = vmatprep.subr.mxu0 0.0
    %474 = vmatpush1.msra.mxu0 %v214
    %475 = vmatprep.subr.mxu0 0.0
    %476 = vmatpush1.msra.mxu0 0.0
    %477 = vmatprep.subr.mxu0 0.0
    %478 = vmatpush1.msra.mxu0 0.0
    %479 = vmatprep.subr.mxu0 0.0
    %480 = vmatpush1.msra.mxu0 0.0
    %481 = vmatprep.subr.mxu0 0.0
    %482 = vmatpush1.msra.mxu0 0.0
    %483 = vmatprep.subr.mxu0 0.0
    %484 = vmatpush1.msra.mxu0 0.0
    %485 = vmatprep.subr.mxu0 0.0
    %486 = vmatpush1.msra.mxu0 0.0
    %487 = vmatprep.subr.mxu0 0.0
    %488 = vmatpush1.msra.mxu0 0.0
    %489 = vmatprep.subr.mxu0 0.0
    %490 = vmatpush1.msra.mxu0 0.0
    %491 = vmatprep.subr.mxu0 0.0
    %492 = vmatpush1.msra.mxu0 0.0
    %493 = vmatprep.subr.mxu0 0.0
    %494 = vmatpush1.msra.mxu0 0.0
    %495 = vmatprep.subr.mxu0 0.0
    %496 = vmatpush1.msra.mxu0 0.0
    %497 = vmatprep.subr.mxu0 0.0
    %498 = vmatpush1.msra.mxu0 0.0
    %499 = vmatprep.subr.mxu0 0.0
    %500 = vmatpush1.msra.mxu0 0.0
    %501 = vmatprep.subr.mxu0 0.0
    %502 = vmatpush1.msra.mxu0 0.0
    %503 = vmatprep.subr.mxu0 0.0
    %504 = vmatpush1.msra.mxu0 0.0
    %505 = vmatprep.subr.mxu0 0.0
    %506 = vmatpush1.msra.mxu0 0.0
    %507 = vmatprep.subr.mxu0 0.0
    %508 = vmatpush1.msra.mxu0 0.0
    %509 = vmatprep.subr.mxu0 0.0
    %510 = vmatpush1.msra.mxu0 0.0
    %511 = vmatprep.subr.mxu0 0.0
    %512 = vmatpush1.msra.mxu0 0.0
    %513 = vmatprep.subr.mxu0 0.0
    %514 = vmatpush1.msra.mxu0 0.0
    %515 = vmatprep.subr.mxu0 0.0
    %516 = vmatpush1.msra.mxu0 0.0
    %517 = vmatprep.subr.mxu0 0.0
    %518 = vmatpush1.msra.mxu0 0.0
    %519 = vmatprep.subr.mxu0 0.0
    %520 = vmatpush1.msra.mxu0 0.0
    %521 = vmatprep.subr.mxu0 0.0
    %522 = vmatpush1.msra.mxu0 0.0
    %523 = vmatprep.subr.mxu0 0.0
    %524 = vmatpush1.msra.mxu0 0.0
    %525 = vmatprep.subr.mxu0 0.0
    %526 = vmatpush1.msra.mxu0 0.0
    %527 = vmatprep.subr.mxu0 0.0
    %528 = vmatpush1.msra.mxu0 0.0
    %529 = vmatprep.subr.mxu0 0.0
    %530 = vmatpush1.msra.mxu0 0.0
    %531 = vmatprep.subr.mxu0 0.0
    %532 = vmatpush1.msra.mxu0 0.0
    %533 = vmatprep.subr.mxu0 0.0
    %534 = vmatpush1.msra.mxu0 0.0
    %535 = vmatprep.mubr.f32.mxu0 0.0
    %536 = vmatmul.mubr.f32.gmra.mrb[0].mxu0 %v259
    %v537 = vpop.f32.mrb[0].mxu0
    %v538 = vadd.f32 1e-12, %v537
    %v539 = vpop.f32.mrb[0].mxu0
    %540 = vdwg.mxu0
    %541 = vmatprep.subr.mxu0 0.0
    %542 = vmatpush1.msra.mxu0 %v219
    %543 = vmatprep.subr.mxu0 0.0
    %544 = vmatpush1.msra.mxu0 %v224
    %545 = vmatprep.subr.mxu0 0.0
    %546 = vmatpush1.msra.mxu0 0.0
    %547 = vmatprep.subr.mxu0 0.0
    %548 = vmatpush1.msra.mxu0 0.0
    %549 = vmatprep.subr.mxu0 0.0
    %550 = vmatpush1.msra.mxu0 0.0
    %551 = vmatprep.subr.mxu0 0.0
    %552 = vmatpush1.msra.mxu0 0.0
    %553 = vmatprep.subr.mxu0 0.0
    %554 = vmatpush1.msra.mxu0 0.0
    %555 = vmatprep.subr.mxu0 0.0
    %556 = vmatpush1.msra.mxu0 0.0
    %557 = vmatprep.subr.mxu0 0.0
    %558 = vmatpush1.msra.mxu0 0.0
    %559 = vmatprep.subr.mxu0 0.0
    %560 = vmatpush1.msra.mxu0 0.0
    %561 = vmatprep.subr.mxu0 0.0
    %562 = vmatpush1.msra.mxu0 0.0
    %563 = vmatprep.subr.mxu0 0.0
    %564 = vmatpush1.msra.mxu0 0.0
    %565 = vmatprep.subr.mxu0 0.0
    %566 = vmatpush1.msra.mxu0 0.0
    %567 = vmatprep.subr.mxu0 0.0
    %568 = vmatpush1.msra.mxu0 0.0
    %569 = vmatprep.subr.mxu0 0.0
    %570 = vmatpush1.msra.mxu0 0.0
    %571 = vmatprep.subr.mxu0 0.0
    %572 = vmatpush1.msra.mxu0 0.0
    %573 = vmatprep.subr.mxu0 0.0
    %574 = vmatpush1.msra.mxu0 0.0
    %575 = vmatprep.subr.mxu0 0.0
    %576 = vmatpush1.msra.mxu0 0.0
    %577 = vmatprep.subr.mxu0 0.0
    %578 = vmatpush1.msra.mxu0 0.0
    %579 = vmatprep.subr.mxu0 0.0
    %580 = vmatpush1.msra.mxu0 0.0
    %581 = vmatprep.subr.mxu0 0.0
    %582 = vmatpush1.msra.mxu0 0.0
    %583 = vmatprep.subr.mxu0 0.0
    %584 = vmatpush1.msra.mxu0 0.0
    %585 = vmatprep.subr.mxu0 0.0
    %586 = vmatpush1.msra.mxu0 0.0
    %587 = vmatprep.subr.mxu0 0.0
    %588 = vmatpush1.msra.mxu0 0.0
    %589 = vmatprep.subr.mxu0 0.0
    %590 = vmatpush1.msra.mxu0 0.0
    %591 = vmatprep.subr.mxu0 0.0
    %592 = vmatpush1.msra.mxu0 0.0
    %593 = vmatprep.subr.mxu0 0.0
    %594 = vmatpush1.msra.mxu0 0.0
    %595 = vmatprep.subr.mxu0 0.0
    %596 = vmatpush1.msra.mxu0 0.0
    %597 = vmatprep.subr.mxu0 0.0
    %598 = vmatpush1.msra.mxu0 0.0
    %599 = vmatprep.subr.mxu0 0.0
    %600 = vmatpush1.msra.mxu0 0.0
    %601 = vmatprep.subr.mxu0 0.0
    %602 = vmatpush1.msra.mxu0 0.0
    %603 = vmatprep.subr.mxu0 0.0
    %604 = vmatpush1.msra.mxu0 0.0
    %605 = vmatprep.mubr.f32.mxu0 0.0
    %606 = vmatmul.mubr.f32.gmra.mrb[0].mxu0 %v259
    %v607 = vpop.f32.mrb[0].mxu0
    %v608 = vadd.f32 1e-12, %v607
    %v609 = vpop.f32.mrb[0].mxu0
    %610 = vdwg.mxu0
    %611 = vmatprep.subr.mxu0 0.0
    %612 = vmatpush1.msra.mxu0 %v229
    %613 = vmatprep.subr.mxu0 0.0
    %614 = vmatpush1.msra.mxu0 %v234
    %615 = vmatprep.subr.mxu0 0.0
    %616 = vmatpush1.msra.mxu0 0.0
    %617 = vmatprep.subr.mxu0 0.0
    %618 = vmatpush1.msra.mxu0 0.0
    %619 = vmatprep.subr.mxu0 0.0
    %620 = vmatpush1.msra.mxu0 0.0
    %621 = vmatprep.subr.mxu0 0.0
    %622 = vmatpush1.msra.mxu0 0.0
    %623 = vmatprep.subr.mxu0 0.0
    %624 = vmatpush1.msra.mxu0 0.0
    %625 = vmatprep.subr.mxu0 0.0
    %626 = vmatpush1.msra.mxu0 0.0
    %627 = vmatprep.subr.mxu0 0.0
    %628 = vmatpush1.msra.mxu0 0.0
    %629 = vmatprep.subr.mxu0 0.0
    %630 = vmatpush1.msra.mxu0 0.0
    %631 = vmatprep.subr.mxu0 0.0
    %632 = vmatpush1.msra.mxu0 0.0
    %633 = vmatprep.subr.mxu0 0.0
    %634 = vmatpush1.msra.mxu0 0.0
    %635 = vmatprep.subr.mxu0 0.0
    %636 = vmatpush1.msra.mxu0 0.0
    %637 = vmatprep.subr.mxu0 0.0
    %638 = vmatpush1.msra.mxu0 0.0
    %639 = vmatprep.subr.mxu0 0.0
    %640 = vmatpush1.msra.mxu0 0.0
    %641 = vmatprep.subr.mxu0 0.0
    %642 = vmatpush1.msra.mxu0 0.0
    %643 = vmatprep.subr.mxu0 0.0
    %644 = vmatpush1.msra.mxu0 0.0
    %645 = vmatprep.subr.mxu0 0.0
    %646 = vmatpush1.msra.mxu0 0.0
    %647 = vmatprep.subr.mxu0 0.0
    %648 = vmatpush1.msra.mxu0 0.0
    %649 = vmatprep.subr.mxu0 0.0
    %650 = vmatpush1.msra.mxu0 0.0
    %651 = vmatprep.subr.mxu0 0.0
    %652 = vmatpush1.msra.mxu0 0.0
    %653 = vmatprep.subr.mxu0 0.0
    %654 = vmatpush1.msra.mxu0 0.0
    %655 = vmatprep.subr.mxu0 0.0
    %656 = vmatpush1.msra.mxu0 0.0
    %657 = vmatprep.subr.mxu0 0.0
    %658 = vmatpush1.msra.mxu0 0.0
    %659 = vmatprep.subr.mxu0 0.0
    %660 = vmatpush1.msra.mxu0 0.0
    %661 = vmatprep.subr.mxu0 0.0
    %662 = vmatpush1.msra.mxu0 0.0
    %663 = vmatprep.subr.mxu0 0.0
    %664 = vmatpush1.msra.mxu0 0.0
    %665 = vmatprep.subr.mxu0 0.0
    %666 = vmatpush1.msra.mxu0 0.0
    %667 = vmatprep.subr.mxu0 0.0
    %668 = vmatpush1.msra.mxu0 0.0
    %669 = vmatprep.subr.mxu0 0.0
    %670 = vmatpush1.msra.mxu0 0.0
    %671 = vmatprep.subr.mxu0 0.0
    %672 = vmatpush1.msra.mxu0 0.0
    %673 = vmatprep.subr.mxu0 0.0
    %674 = vmatpush1.msra.mxu0 0.0
    %675 = vmatprep.mubr.f32.mxu0 0.0
    %676 = vmatmul.mubr.f32.gmra.mrb[0].mxu0 %v259
    %v677 = vpop.f32.mrb[0].mxu0
    %v678 = vadd.f32 1e-12, %v677
    %v679 = vpop.f32.mrb[0].mxu0
    %680 = vdwg.mxu0
    %681 = vmatprep.subr.mxu0 0.0
    %682 = vmatpush1.msra.mxu0 %v239
    %683 = vmatprep.subr.mxu0 0.0
    %684 = vmatpush1.msra.mxu0 %v244
    %685 = vmatprep.subr.mxu0 0.0
    %686 = vmatpush1.msra.mxu0 0.0
    %687 = vmatprep.subr.mxu0 0.0
    %688 = vmatpush1.msra.mxu0 0.0
    %689 = vmatprep.subr.mxu0 0.0
    %690 = vmatpush1.msra.mxu0 0.0
    %691 = vmatprep.subr.mxu0 0.0
    %692 = vmatpush1.msra.mxu0 0.0
    %693 = vmatprep.subr.mxu0 0.0
    %694 = vmatpush1.msra.mxu0 0.0
    %695 = vmatprep.subr.mxu0 0.0
    %696 = vmatpush1.msra.mxu0 0.0
    %697 = vmatprep.subr.mxu0 0.0
    %698 = vmatpush1.msra.mxu0 0.0
    %699 = vmatprep.subr.mxu0 0.0
    %700 = vmatpush1.msra.mxu0 0.0
    %701 = vmatprep.subr.mxu0 0.0
    %702 = vmatpush1.msra.mxu0 0.0
    %703 = vmatprep.subr.mxu0 0.0
    %704 = vmatpush1.msra.mxu0 0.0
    %705 = vmatprep.subr.mxu0 0.0
    %706 = vmatpush1.msra.mxu0 0.0
    %707 = vmatprep.subr.mxu0 0.0
    %708 = vmatpush1.msra.mxu0 0.0
    %709 = vmatprep.subr.mxu0 0.0
    %710 = vmatpush1.msra.mxu0 0.0
    %711 = vmatprep.subr.mxu0 0.0
    %712 = vmatpush1.msra.mxu0 0.0
    %713 = vmatprep.subr.mxu0 0.0
    %714 = vmatpush1.msra.mxu0 0.0
    %715 = vmatprep.subr.mxu0 0.0
    %716 = vmatpush1.msra.mxu0 0.0
    %717 = vmatprep.subr.mxu0 0.0
    %718 = vmatpush1.msra.mxu0 0.0
    %719 = vmatprep.subr.mxu0 0.0
    %720 = vmatpush1.msra.mxu0 0.0
    %721 = vmatprep.subr.mxu0 0.0
    %722 = vmatpush1.msra.mxu0 0.0
    %723 = vmatprep.subr.mxu0 0.0
    %724 = vmatpush1.msra.mxu0 0.0
    %725 = vmatprep.subr.mxu0 0.0
    %726 = vmatpush1.msra.mxu0 0.0
    %727 = vmatprep.subr.mxu0 0.0
    %728 = vmatpush1.msra.mxu0 0.0
    %729 = vmatprep.subr.mxu0 0.0
    %730 = vmatpush1.msra.mxu0 0.0
    %731 = vmatprep.subr.mxu0 0.0
    %732 = vmatpush1.msra.mxu0 0.0
    %733 = vmatprep.subr.mxu0 0.0
    %734 = vmatpush1.msra.mxu0 0.0
    %735 = vmatprep.subr.mxu0 0.0
    %736 = vmatpush1.msra.mxu0 0.0
    %737 = vmatprep.subr.mxu0 0.0
    %738 = vmatpush1.msra.mxu0 0.0
    %739 = vmatprep.subr.mxu0 0.0
    %740 = vmatpush1.msra.mxu0 0.0
    %741 = vmatprep.subr.mxu0 0.0
    %742 = vmatpush1.msra.mxu0 0.0
    %743 = vmatprep.subr.mxu0 0.0
    %744 = vmatpush1.msra.mxu0 0.0
    %745 = vmatprep.mubr.f32.mxu0 0.0
    %746 = vmatmul.mubr.f32.gmra.mrb[0].mxu0 %v259
    %v747 = vpop.f32.mrb[0].mxu0
    %v748 = vadd.f32 1e-12, %v747
    %v749 = vpop.f32.mrb[0].mxu0
    %750 = vdwg.mxu0
    %751 = vmatprep.subr.mxu0 0.0
    %752 = vmatpush1.msra.mxu0 %v249
    %753 = vmatprep.subr.mxu0 0.0
    %754 = vmatpush1.msra.mxu0 %v254
    %755 = vmatprep.subr.mxu0 0.0
    %756 = vmatpush1.msra.mxu0 0.0
    %757 = vmatprep.subr.mxu0 0.0
    %758 = vmatpush1.msra.mxu0 0.0
    %759 = vmatprep.subr.mxu0 0.0
    %760 = vmatpush1.msra.mxu0 0.0
    %761 = vmatprep.subr.mxu0 0.0
    %762 = vmatpush1.msra.mxu0 0.0
    %763 = vmatprep.subr.mxu0 0.0
    %764 = vmatpush1.msra.mxu0 0.0
    %765 = vmatprep.subr.mxu0 0.0
    %766 = vmatpush1.msra.mxu0 0.0
    %767 = vmatprep.subr.mxu0 0.0
    %768 = vmatpush1.msra.mxu0 0.0
    %769 = vmatprep.subr.mxu0 0.0
    %770 = vmatpush1.msra.mxu0 0.0
    %771 = vmatprep.subr.mxu0 0.0
    %772 = vmatpush1.msra.mxu0 0.0
    %773 = vmatprep.subr.mxu0 0.0
    %774 = vmatpush1.msra.mxu0 0.0
    %775 = vmatprep.subr.mxu0 0.0
    %776 = vmatpush1.msra.mxu0 0.0
    %777 = vmatprep.subr.mxu0 0.0
    %778 = vmatpush1.msra.mxu0 0.0
    %779 = vmatprep.subr.mxu0 0.0
    %780 = vmatpush1.msra.mxu0 0.0
    %781 = vmatprep.subr.mxu0 0.0
    %782 = vmatpush1.msra.mxu0 0.0
    %783 = vmatprep.subr.mxu0 0.0
    %784 = vmatpush1.msra.mxu0 0.0
    %785 = vmatprep.subr.mxu0 0.0
    %786 = vmatpush1.msra.mxu0 0.0
    %787 = vmatprep.subr.mxu0 0.0
    %788 = vmatpush1.msra.mxu0 0.0
    %789 = vmatprep.subr.mxu0 0.0
    %790 = vmatpush1.msra.mxu0 0.0
    %791 = vmatprep.subr.mxu0 0.0
    %792 = vmatpush1.msra.mxu0 0.0
    %793 = vmatprep.subr.mxu0 0.0
    %794 = vmatpush1.msra.mxu0 0.0
    %795 = vmatprep.subr.mxu0 0.0
    %796 = vmatpush1.msra.mxu0 0.0
    %797 = vmatprep.subr.mxu0 0.0
    %798 = vmatpush1.msra.mxu0 0.0
    %799 = vmatprep.subr.mxu0 0.0
    %800 = vmatpush1.msra.mxu0 0.0
    %801 = vmatprep.subr.mxu0 0.0
    %802 = vmatpush1.msra.mxu0 0.0
    %803 = vmatprep.subr.mxu0 0.0
    %804 = vmatpush1.msra.mxu0 0.0
    %805 = vmatprep.subr.mxu0 0.0
    %806 = vmatpush1.msra.mxu0 0.0
    %807 = vmatprep.subr.mxu0 0.0
    %808 = vmatpush1.msra.mxu0 0.0
    %809 = vmatprep.subr.mxu0 0.0
    %810 = vmatpush1.msra.mxu0 0.0
    %811 = vmatprep.subr.mxu0 0.0
    %812 = vmatpush1.msra.mxu0 0.0
    %813 = vmatprep.subr.mxu0 0.0
    %814 = vmatpush1.msra.mxu0 0.0
    %815 = vmatprep.mubr.f32.mxu0 0.0
    %816 = vmatmul.mubr.f32.gmra.mrb[0].mxu0 %v259
    %v817 = vpop.f32.mrb[0].mxu0
    %v818 = vadd.f32 1e-12, %v817
    %v819 = vpop.f32.mrb[0].mxu0
    %820 = vdwg.mxu0
    %v821 = vrsqrt.pop %v328
    %v822 = vmul.f32 %v328, %v821
    %vm823 = vcmp.eq.f32.partialorder %v328, inf
    %v824 = vsel %vm823, %v328, %v822
    %vm825 = vcmp.eq.f32.partialorder %v328, 0.0
    %v826 = vand.u32 %v328, 2147483648
    %v827 = vsel %vm825, %v826, %v824
    %v828 = vrsqrt.pop %v398
    %v829 = vmul.f32 %v398, %v828
    %vm830 = vcmp.eq.f32.partialorder %v398, inf
    %v831 = vsel %vm830, %v398, %v829
    %vm832 = vcmp.eq.f32.partialorder %v398, 0.0
    %v833 = vand.u32 %v398, 2147483648
    %v834 = vsel %vm832, %v833, %v831
    %v835 = vrsqrt.pop %v468
    %v836 = vmul.f32 %v468, %v835
    %vm837 = vcmp.eq.f32.partialorder %v468, inf
    %v838 = vsel %vm837, %v468, %v836
    %vm839 = vcmp.eq.f32.partialorder %v468, 0.0
    %v840 = vand.u32 %v468, 2147483648
    %v841 = vsel %vm839, %v840, %v838
    %v842 = vrsqrt.pop %v538
    %v843 = vmul.f32 %v538, %v842
    %vm844 = vcmp.eq.f32.partialorder %v538, inf
    %v845 = vsel %vm844, %v538, %v843
    %vm846 = vcmp.eq.f32.partialorder %v538, 0.0
    %v847 = vand.u32 %v538, 2147483648
    %v848 = vsel %vm846, %v847, %v845
    %v849 = vrsqrt.pop %v608
    %v850 = vmul.f32 %v608, %v849
    %vm851 = vcmp.eq.f32.partialorder %v608, inf
    %v852 = vsel %vm851, %v608, %v850
    %vm853 = vcmp.eq.f32.partialorder %v608, 0.0
    %v854 = vand.u32 %v608, 2147483648
    %v855 = vsel %vm853, %v854, %v852
    %v856 = vrsqrt.pop %v678
    %v857 = vmul.f32 %v678, %v856
    %vm858 = vcmp.eq.f32.partialorder %v678, inf
    %v859 = vsel %vm858, %v678, %v857
    %vm860 = vcmp.eq.f32.partialorder %v678, 0.0
    %v861 = vand.u32 %v678, 2147483648
    %v862 = vsel %vm860, %v861, %v859
    %v863 = vrsqrt.pop %v748
    %v864 = vmul.f32 %v748, %v863
    %vm865 = vcmp.eq.f32.partialorder %v748, inf
    %v866 = vsel %vm865, %v748, %v864
    %vm867 = vcmp.eq.f32.partialorder %v748, 0.0
    %v868 = vand.u32 %v748, 2147483648
    %v869 = vsel %vm867, %v868, %v866
    %v870 = vrsqrt.pop %v818
    %v871 = vmul.f32 %v818, %v870
    %vm872 = vcmp.eq.f32.partialorder %v818, inf
    %v873 = vsel %vm872, %v818, %v871
    %vm874 = vcmp.eq.f32.partialorder %v818, 0.0
    %v875 = vand.u32 %v818, 2147483648
    %v876 = vsel %vm874, %v875, %v873
    %vm877 = vcmask 64512
    %878 = vst.msk [vmem:[#allocation5] sm:$0xff] %vm877, %v827
    %879 = vst.msk [vmem:[#allocation5 + $0x8] sm:$0xff] %vm877, %v834
    %880 = vst.msk [vmem:[#allocation5 + $0x10] sm:$0xff] %vm877, %v841
    %881 = vst.msk [vmem:[#allocation5 + $0x18] sm:$0xff] %vm877, %v848
    %882 = vst.msk [vmem:[#allocation5 + $0x20] sm:$0xff] %vm877, %v855
    %883 = vst.msk [vmem:[#allocation5 + $0x28] sm:$0xff] %vm877, %v862
    %884 = vst.msk [vmem:[#allocation5 + $0x30] sm:$0xff] %vm877, %v869
    %885 = vst.msk [vmem:[#allocation5 + $0x38] sm:$0xff] %vm877, %v876
    // Predicated region
    $region18: #{tpu_custom_call.1} parent=1 // pred_check
      _
    $region19: #{tpu_custom_call.1} parent=1 // pred_check_branch
      %887 = sbr.rel (0) target = $region21
    $region20: #{tpu_custom_call.1} parent=1 // pred_region
      %s889 = ssub.s32 1024, 1024
      %890 = vsyncadd [#allocation4], %s889
      %s891 = sshll.u32 [#allocation5], 4
      %s892 = int_to_ptr.vmem [resolvable:$true] %s891
      %897 = dma.vmem_to_hbm [thread:$0]  %s892, 1024, %s3, [#allocation4], 128, 128, 8
    $region21: #{tpu_custom_call.1} parent=1 // pred_fallthru
      _
    // Predicated region
    $region22: #{tpu_custom_call.1} parent=1 // pred_check
      _
    $region23: #{tpu_custom_call.1} parent=1 // pred_check_branch
      %899 = sbr.rel (0) target = $region25
    $region24: #{tpu_custom_call.1} parent=1 // pred_region
      %900 = dma.done [#allocation4], 1024
    $region25: #{tpu_custom_call.1} parent=1 // pred_fallthru
      _
    %901 = vsyncpa [#allocation3], 1
    %902 = vsyncpa [#allocation4], 1

</llo_original>
